<compile_context>
chip_gen: v7x
topology: tpu7x:2x2x1
jax: 0.10.0
libtpu: 0.0.40
codegen_flags: <defaults>
</compile_context>

<pallas_src>
import jax
import jax.numpy as jnp
from jax.experimental import pallas as pl
from jax.experimental.pallas import tpu as pltpu


# ----------------------------- model config ---------------------------------
SHARE_DIM = [16, 32, 32]      # share_encoder: Linear(16,32)+Tanh, Linear(32,32)+Tanh
REGRESSOR_DIM = [32, 16, 1]   # y_mean_regressor: Linear(32,16)+Tanh, Linear(16,1)
BATCH = 16


# ------------------------------ Pallas kernel --------------------------------
def ssvae_fwd_kernel(x_ref,
                     w_s0_ref, b_s0_ref, w_s1_ref, b_s1_ref,   # share_encoder
                     w_r0_ref, b_r0_ref, w_r1_ref, b_r1_ref,   # y_mean_regressor
                     out_ref):
    h = x_ref[...]

    # share_encoder: hidden Linear + Tanh, last Linear + Tanh (output_act=Tanh)
    h = jnp.tanh(jnp.dot(h, w_s0_ref[...], preferred_element_type=jnp.float32)
                 + b_s0_ref[...])
    h = jnp.tanh(jnp.dot(h, w_s1_ref[...], preferred_element_type=jnp.float32)
                 + b_s1_ref[...])

    # y_mean_regressor: hidden Linear + Tanh, last Linear (no output act)
    h = jnp.tanh(jnp.dot(h, w_r0_ref[...], preferred_element_type=jnp.float32)
                 + b_r0_ref[...])
    pred = jnp.dot(h, w_r1_ref[...], preferred_element_type=jnp.float32) + b_r1_ref[...]

    out_ref[...] = pred.astype(out_ref.dtype)


# ------------------------------ wrapper / glue --------------------------------
def pack_params(params):
    """One-time layout prep (OUTSIDE the jitted path):
    nn.Linear W:(out,in) -> (in,out) so the kernel computes h @ W + b on the MXU;
    bias (out,) -> (1,out) row for lane-broadcast add."""
    flat = []
    for (w, b) in params:
        flat.append(jnp.asarray(w, jnp.float32).T)       # (in, out)
        flat.append(jnp.asarray(b, jnp.float32)[None, :])  # (1, out)
    return tuple(flat)


@jax.jit
def ssvae_forward(x, flat_params):
    """flat_params: tuple from pack_params(); x: (B, D_in) f32.
    Single kernel invocation (no grid); everything resident in VMEM."""
    B = x.shape[0]
    out_dim = flat_params[-1].shape[-1]   # == 1

    vmem_spec = pl.BlockSpec(memory_space=pltpu.MemorySpace.VMEM)

    # TODO(synk): if batch grows large (>= hundreds of rows), reintroduce a batch-only
    # grid with big row tiles (256-1024) to amortize fixed per-step overhead.
    return pl.pallas_call(
        ssvae_fwd_kernel,
        out_shape=jax.ShapeDtypeStruct((B, out_dim), jnp.float32),
        in_specs=[vmem_spec] * (1 + len(flat_params)),
        out_specs=vmem_spec,
    )(x, *flat_params)


# ------------------------ deterministic param init ---------------------------
def init_fc_params(key, dims_list):
    """Mirror FC.__init__ layer shapes. Hidden layers: dims[0]->...->dims[-2];
    lastLayer: dims[-2]->dims[-1]. Weights ~ small random, biases zero.
    (Exact torch init distribution is not required for kernel semantics.)"""
    params = []
    neurons = dims_list[:-1]
    layer_dims = [(neurons[i - 1], neurons[i]) for i in range(1, len(neurons))]
    layer_dims.append((neurons[-1], dims_list[-1]))
    for (fan_in, fan_out) in layer_dims:
        key, wk = jax.random.split(key)
        scale = jnp.sqrt(2.0 / (fan_in + fan_out))
        w = jax.random.normal(wk, (fan_out, fan_in), dtype=jnp.float32) * scale
        b = jnp.zeros((fan_out,), dtype=jnp.float32)
        params.append((w, b))
    return params, key


def reference_forward(x, params):
    """Pure-JAX reference of SSVAE.forward."""
    w_s0, b_s0 = params[0]
    w_s1, b_s1 = params[1]
    w_r0, b_r0 = params[2]
    w_r1, b_r1 = params[3]
    h = jnp.tanh(x @ w_s0.T + b_s0)
    h = jnp.tanh(h @ w_s1.T + b_s1)
    h = jnp.tanh(h @ w_r0.T + b_r0)
    return h @ w_r1.T + b_r1


# ---------------------------------- main --------------------------------------
if __name__ == "__main__":
    key = jax.random.PRNGKey(0)

    # share_encoder params (Tanh / Tanh) then y_mean_regressor params (Tanh / None)
    share_params, key = init_fc_params(key, SHARE_DIM)
    reg_params, key = init_fc_params(key, REGRESSOR_DIM)
    params = share_params + reg_params          # 4 (W, b) pairs total

    flat_params = pack_params(params)           # transpose/reshape hoisted out of jit

    key, xk = jax.random.split(key)
    x = jax.random.normal(xk, (BATCH, SHARE_DIM[0]), dtype=jnp.float32)

    pred = ssvae_forward(x, flat_params)
    pred = jax.block_until_ready(pred)

    ref = reference_forward(x, params)
    assert pred.shape == (BATCH, 1)
    assert jnp.allclose(pred, ref, atol=1e-5, rtol=1e-5), "mismatch vs reference"

    print("KERNEL_OK")
</pallas_src>

<mosaic_0001>
module attributes {stable_mosaic.version = 11 : i64} {
  func.func @ssvae_fwd_kernel(%arg0: memref<16x16xf32, #tpu.memory_space<vmem>>, %arg1: memref<16x32xf32, #tpu.memory_space<vmem>>, %arg2: memref<1x32xf32, #tpu.memory_space<vmem>>, %arg3: memref<32x32xf32, #tpu.memory_space<vmem>>, %arg4: memref<1x32xf32, #tpu.memory_space<vmem>>, %arg5: memref<32x16xf32, #tpu.memory_space<vmem>>, %arg6: memref<1x16xf32, #tpu.memory_space<vmem>>, %arg7: memref<16x1xf32, #tpu.memory_space<vmem>>, %arg8: memref<1x1xf32, #tpu.memory_space<vmem>>, %arg9: memref<16x1xf32, #tpu.memory_space<vmem>>) attributes {dimension_semantics = [], scalar_prefetch = 0 : i64, scratch_operands = 0 : i64, tpu.core_type = #tpu.core_type<tc>} {
    %c0 = arith.constant 0 : index
    %c0_0 = arith.constant 0 : index
    %0 = vector.load %arg0[%c0, %c0_0] : memref<16x16xf32, #tpu.memory_space<vmem>>, vector<16x16xf32>
    %c0_1 = arith.constant 0 : index
    %c0_2 = arith.constant 0 : index
    %1 = vector.load %arg1[%c0_1, %c0_2] : memref<16x32xf32, #tpu.memory_space<vmem>>, vector<16x32xf32>
    %cst = arith.constant dense<0.000000e+00> : vector<16x32xf32>
    %2 = tpu.matmul %0, %1, %cst {dimension_numbers = #tpu.dot_dimension_numbers<[1], [0], [0], [1], [0, 0, 1, 1], [], []>} : vector<16x16xf32>, vector<16x32xf32>, vector<16x32xf32> -> vector<16x32xf32>
    %c0_3 = arith.constant 0 : index
    %c0_4 = arith.constant 0 : index
    %3 = vector.load %arg2[%c0_3, %c0_4] : memref<1x32xf32, #tpu.memory_space<vmem>>, vector<1x32xf32>
    %4 = vector.broadcast %3 : vector<1x32xf32> to vector<16x32xf32>
    %5 = arith.addf %2, %4 : vector<16x32xf32>
    %6 = math.tanh %5 : vector<16x32xf32>
    %c0_5 = arith.constant 0 : index
    %c0_6 = arith.constant 0 : index
    %7 = vector.load %arg3[%c0_5, %c0_6] : memref<32x32xf32, #tpu.memory_space<vmem>>, vector<32x32xf32>
    %cst_7 = arith.constant dense<0.000000e+00> : vector<16x32xf32>
    %8 = tpu.matmul %6, %7, %cst_7 {dimension_numbers = #tpu.dot_dimension_numbers<[1], [0], [0], [1], [0, 0, 1, 1], [], []>} : vector<16x32xf32>, vector<32x32xf32>, vector<16x32xf32> -> vector<16x32xf32>
    %c0_8 = arith.constant 0 : index
    %c0_9 = arith.constant 0 : index
    %9 = vector.load %arg4[%c0_8, %c0_9] : memref<1x32xf32, #tpu.memory_space<vmem>>, vector<1x32xf32>
    %10 = vector.broadcast %9 : vector<1x32xf32> to vector<16x32xf32>
    %11 = arith.addf %8, %10 : vector<16x32xf32>
    %12 = math.tanh %11 : vector<16x32xf32>
    %c0_10 = arith.constant 0 : index
    %c0_11 = arith.constant 0 : index
    %13 = vector.load %arg5[%c0_10, %c0_11] : memref<32x16xf32, #tpu.memory_space<vmem>>, vector<32x16xf32>
    %cst_12 = arith.constant dense<0.000000e+00> : vector<16x16xf32>
    %14 = tpu.matmul %12, %13, %cst_12 {dimension_numbers = #tpu.dot_dimension_numbers<[1], [0], [0], [1], [0, 0, 1, 1], [], []>} : vector<16x32xf32>, vector<32x16xf32>, vector<16x16xf32> -> vector<16x16xf32>
    %c0_13 = arith.constant 0 : index
    %c0_14 = arith.constant 0 : index
    %15 = vector.load %arg6[%c0_13, %c0_14] : memref<1x16xf32, #tpu.memory_space<vmem>>, vector<1x16xf32>
    %16 = vector.broadcast %15 : vector<1x16xf32> to vector<16x16xf32>
    %17 = arith.addf %14, %16 : vector<16x16xf32>
    %18 = math.tanh %17 : vector<16x16xf32>
    %c0_15 = arith.constant 0 : index
    %c0_16 = arith.constant 0 : index
    %19 = vector.load %arg7[%c0_15, %c0_16] : memref<16x1xf32, #tpu.memory_space<vmem>>, vector<16x1xf32>
    %cst_17 = arith.constant dense<0.000000e+00> : vector<16x1xf32>
    %20 = tpu.matmul %18, %19, %cst_17 {dimension_numbers = #tpu.dot_dimension_numbers<[1], [0], [0], [1], [0, 0, 1, 1], [], []>} : vector<16x16xf32>, vector<16x1xf32>, vector<16x1xf32> -> vector<16x1xf32>
    %c0_18 = arith.constant 0 : index
    %c0_19 = arith.constant 0 : index
    %21 = vector.load %arg8[%c0_18, %c0_19] : memref<1x1xf32, #tpu.memory_space<vmem>>, vector<1x1xf32>
    %22 = vector.broadcast %21 : vector<1x1xf32> to vector<16x1xf32>
    %23 = arith.addf %20, %22 : vector<16x1xf32>
    %c0_20 = arith.constant 0 : index
    %c0_21 = arith.constant 0 : index
    %24 = vector.load %arg9[%c0_20, %c0_21] : memref<16x1xf32, #tpu.memory_space<vmem>>, vector<16x1xf32>
    tpu.vector_store %arg9[%c0_20, %c0_21], %23 {strides = array<i32>} : memref<16x1xf32, #tpu.memory_space<vmem>>, vector<16x1xf32>,
    return
  }
}

</mosaic_0001>

<llo_original>
// kernel: ssvae_forward.1
$region0: #{ssvae_forward.1}
  #allocation0 [shape = 'u32[]', space=smem, size = 0x4, offset = 0x4, fixed_abs, tag = 'smem constant byte address 0x4 - core index']
  #allocation1 [shape = 'u32[144,128]{1,0:T(1,128)}', space=vmem, size = 0x12000, scoped, tag = 'internal scratch']
  #allocation2 [shape = 'f32[1,1]{1,0:T(1,128)S(1)}', space=vmem, size = 0x200, scoped, tag = 'scoped memory for ssvae_forward.1']
  %s0 = inlined_call_operand.vmem [shape: f32[16,16], index: 0, kind: input, shape index: {}]
  %s1 = inlined_call_operand.vmem [shape: f32[16,32], index: 1, kind: input, shape index: {}]
  %s2 = inlined_call_operand.hbm [shape: f32[1,32], index: 2, kind: input, shape index: {}]
  %s3 = inlined_call_operand.vmem [shape: f32[32,32], index: 3, kind: input, shape index: {}]
  %s4 = inlined_call_operand.vmem [shape: f32[1,32], index: 4, kind: input, shape index: {}]
  %s5 = inlined_call_operand.vmem [shape: f32[32,16], index: 5, kind: input, shape index: {}]
  %s6 = inlined_call_operand.vmem [shape: f32[1,16], index: 6, kind: input, shape index: {}]
  %s7 = inlined_call_operand.vmem [shape: f32[16,1], index: 7, kind: input, shape index: {}]
  %s8 = inlined_call_operand.<no memory space> [shape: f32[1,1], index: 8, kind: input, shape index: {}]
  %s9 = inlined_call_operand.vmem [shape: f32[16,1], index: 9, kind: output, shape index: {}]
  %s10 = sld [smem:[#allocation0]]
  $region50: #{ssvae_forward.1} parent=0
    _
  %s12 = ssub.s32 1, %s10
  %s13 = scalar_select 0, %s12, %s10
  %v14 = vstv %s8
  %15 = vst [vmem:[#allocation2] sm:$0x1] %v14
  $region1: #{ssvae_forward.1} parent=0
    #allocation3 [shape = 'u8[512]{0}', space=vmem, size = 0x400, scoped, tag = 'input window, operand 2, single buffered']
    #allocation4 [shape = 's32[1]{0}', space=sflag, size = 0x4, scoped, tag = 'scoped memory for ssvae_forward.1']
    %16 = vsyncpa [#allocation4], 0
    // Predicated region
    $region2: #{ssvae_forward.1} parent=1 // pred_check
      _
    $region3: #{ssvae_forward.1} parent=1 // pred_check_branch
      %18 = sbr.rel (0) target = $region5
    $region4: #{ssvae_forward.1} parent=1 // pred_region
      _
    $region5: #{ssvae_forward.1} parent=1 // pred_fallthru
      _
    // Predicated region
    $region6: #{ssvae_forward.1} parent=1 // pred_check
      _
    $region7: #{ssvae_forward.1} parent=1 // pred_check_branch
      %20 = sbr.rel (0) target = $region9
    $region8: #{ssvae_forward.1} parent=1 // pred_region
      _
    $region9: #{ssvae_forward.1} parent=1 // pred_fallthru
      _
    // Predicated region
    $region10: #{ssvae_forward.1} parent=1 // pred_check
      _
    $region11: #{ssvae_forward.1} parent=1 // pred_check_branch
      %22 = sbr.rel (0) target = $region13
    $region12: #{ssvae_forward.1} parent=1 // pred_region
      %s24 = ssub.s32 16, 16
      %25 = vsyncadd [#allocation4], %s24
      %s27 = sshll.u32 [#allocation3], 4
      %s28 = int_to_ptr.vmem [resolvable:$true] %s27
      %30 = dma.hbm_to_vmem [thread:$0]  %s2, 16, %s28, [#allocation4]
    $region13: #{ssvae_forward.1} parent=1 // pred_fallthru
      _
    // Predicated region
    $region14: #{ssvae_forward.1} parent=1 // pred_check
      _
    $region15: #{ssvae_forward.1} parent=1 // pred_check_branch
      %32 = sbr.rel (0) target = $region17
    $region16: #{ssvae_forward.1} parent=1 // pred_region
      _
    $region17: #{ssvae_forward.1} parent=1 // pred_fallthru
      _
    // Predicated region
    $region18: #{ssvae_forward.1} parent=1 // pred_check
      _
    $region19: #{ssvae_forward.1} parent=1 // pred_check_branch
      %34 = sbr.rel (0) target = $region21
    $region20: #{ssvae_forward.1} parent=1 // pred_region
      _
    $region21: #{ssvae_forward.1} parent=1 // pred_fallthru
      _
    // Predicated region
    $region22: #{ssvae_forward.1} parent=1 // pred_check
      _
    $region23: #{ssvae_forward.1} parent=1 // pred_check_branch
      %36 = sbr.rel (0) target = $region25
    $region24: #{ssvae_forward.1} parent=1 // pred_region
      _
    $region25: #{ssvae_forward.1} parent=1 // pred_fallthru
      _
    // Predicated region
    $region26: #{ssvae_forward.1} parent=1 // pred_check
      _
    $region27: #{ssvae_forward.1} parent=1 // pred_check_branch
      %38 = sbr.rel (0) target = $region29
    $region28: #{ssvae_forward.1} parent=1 // pred_region
      _
    $region29: #{ssvae_forward.1} parent=1 // pred_fallthru
      _
    // Predicated region
    $region30: #{ssvae_forward.1} parent=1 // pred_check
      _
    $region31: #{ssvae_forward.1} parent=1 // pred_check_branch
      %40 = sbr.rel (0) target = $region33
    $region32: #{ssvae_forward.1} parent=1 // pred_region
      _
    $region33: #{ssvae_forward.1} parent=1 // pred_fallthru
      _
    // Predicated region
    $region34: #{ssvae_forward.1} parent=1 // pred_check
      _
    $region35: #{ssvae_forward.1} parent=1 // pred_check_branch
      %42 = sbr.rel (0) target = $region37
    $region36: #{ssvae_forward.1} parent=1 // pred_region
      _
    $region37: #{ssvae_forward.1} parent=1 // pred_fallthru
      _
    // Predicated region
    $region38: #{ssvae_forward.1} parent=1 // pred_check
      _
    $region39: #{ssvae_forward.1} parent=1 // pred_check_branch
      %44 = sbr.rel (0) target = $region41
    $region40: #{ssvae_forward.1} parent=1 // pred_region
      %45 = dma.done [#allocation4], 16
    $region41: #{ssvae_forward.1} parent=1 // pred_fallthru
      _
    %v46 = vld [vmem:[%s0] sm:$0xff]
    %v47 = vld [vmem:[%s0 + $0x8] sm:$0xff]
    %v48 = vld [vmem:[%s1] sm:$0xff]
    %v49 = vld [vmem:[%s1 + $0x8] sm:$0xff]
    %v50 = vld [vmem:[#allocation3] sm:$0x1]
    %v52 = vlaneseq
    %v53 = vshrl.u32 %v52, 7
    %v54 = vsub.s32 0, %v53
    %v55 = vrot.slane %v50, %v54
    %vm57 = vcmask 130048
    %v59 = vsel %vm57, %v46, 0
    %v62 = vsel %vm57, %v47, 0
    %64 = vmatprep.subr.mxu0 0.0
    %65 = vmatpush1.msra.mxu0 %v48
    %66 = vmatprep.subr.mxu0 0.0
    %67 = vmatpush1.msra.mxu0 %v49
    %68 = vmatprep.subr.mxu0 0.0
    %69 = vmatpush1.msra.mxu0 0.0
    %70 = vmatprep.subr.mxu0 0.0
    %71 = vmatpush1.msra.mxu0 0.0
    %72 = vmatprep.subr.mxu0 0.0
    %73 = vmatpush1.msra.mxu0 0.0
    %74 = vmatprep.subr.mxu0 0.0
    %75 = vmatpush1.msra.mxu0 0.0
    %76 = vmatprep.subr.mxu0 0.0
    %77 = vmatpush1.msra.mxu0 0.0
    %78 = vmatprep.subr.mxu0 0.0
    %79 = vmatpush1.msra.mxu0 0.0
    %80 = vmatprep.subr.mxu0 0.0
    %81 = vmatpush1.msra.mxu0 0.0
    %82 = vmatprep.subr.mxu0 0.0
    %83 = vmatpush1.msra.mxu0 0.0
    %84 = vmatprep.subr.mxu0 0.0
    %85 = vmatpush1.msra.mxu0 0.0
    %86 = vmatprep.subr.mxu0 0.0
    %87 = vmatpush1.msra.mxu0 0.0
    %88 = vmatprep.subr.mxu0 0.0
    %89 = vmatpush1.msra.mxu0 0.0
    %90 = vmatprep.subr.mxu0 0.0
    %91 = vmatpush1.msra.mxu0 0.0
    %92 = vmatprep.subr.mxu0 0.0
    %93 = vmatpush1.msra.mxu0 0.0
    %94 = vmatprep.subr.mxu0 0.0
    %95 = vmatpush1.msra.mxu0 0.0
    %96 = vmatprep.subr.mxu0 0.0
    %97 = vmatpush1.msra.mxu0 0.0
    %98 = vmatprep.subr.mxu0 0.0
    %99 = vmatpush1.msra.mxu0 0.0
    %100 = vmatprep.subr.mxu0 0.0
    %101 = vmatpush1.msra.mxu0 0.0
    %102 = vmatprep.subr.mxu0 0.0
    %103 = vmatpush1.msra.mxu0 0.0
    %104 = vmatprep.subr.mxu0 0.0
    %105 = vmatpush1.msra.mxu0 0.0
    %106 = vmatprep.subr.mxu0 0.0
    %107 = vmatpush1.msra.mxu0 0.0
    %108 = vmatprep.subr.mxu0 0.0
    %109 = vmatpush1.msra.mxu0 0.0
    %110 = vmatprep.subr.mxu0 0.0
    %111 = vmatpush1.msra.mxu0 0.0
    %112 = vmatprep.subr.mxu0 0.0
    %113 = vmatpush1.msra.mxu0 0.0
    %114 = vmatprep.subr.mxu0 0.0
    %115 = vmatpush1.msra.mxu0 0.0
    %116 = vmatprep.subr.mxu0 0.0
    %117 = vmatpush1.msra.mxu0 0.0
    %118 = vmatprep.subr.mxu0 0.0
    %119 = vmatpush1.msra.mxu0 0.0
    %120 = vmatprep.subr.mxu0 0.0
    %121 = vmatpush1.msra.mxu0 0.0
    %122 = vmatprep.subr.mxu0 0.0
    %123 = vmatpush1.msra.mxu0 0.0
    %124 = vmatprep.subr.mxu0 0.0
    %125 = vmatpush1.msra.mxu0 0.0
    %126 = vmatprep.subr.mxu0 0.0
    %127 = vmatpush1.msra.mxu0 0.0
    %128 = vmatprep.mubr.f32.mxu0 0.0
    %129 = vmatmul.mubr.f32.gmra.mrb[0].mxu0 %v59
    %v130 = vpop.f32.mrb[0].mxu0
    %v131 = vadd.f32 %v55, %v130
    %v132 = vpop.f32.mrb[0].mxu0
    %133 = vmatprep.mubr.f32.mxu0 0.0
    %134 = vmatmul.mubr.f32.gmra.mrb[0].mxu0 %v62
    %v135 = vpop.f32.mrb[0].mxu0
    %v136 = vadd.f32 %v55, %v135
    %v137 = vpop.f32.mrb[0].mxu0
    %138 = vdwg.mxu0
    %v139 = vtanh.pop %v131
    %v140 = vtanh.pop %v136
    %v141 = vld [vmem:[%s3] sm:$0xff]
    %v142 = vld [vmem:[%s3 + $0x8] sm:$0xff]
    %v143 = vld [vmem:[%s3 + $0x10] sm:$0xff]
    %v144 = vld [vmem:[%s3 + $0x18] sm:$0xff]
    %v145 = vld [vmem:[%s4] sm:$0x1]
    %v147 = vlaneseq
    %v148 = vshrl.u32 %v147, 7
    %v149 = vsub.s32 0, %v148
    %v150 = vrot.slane %v145, %v149
    %vm152 = vcmask 261120
    %v154 = vsel %vm152, %v139, 0
    %v157 = vsel %vm152, %v140, 0
    %159 = vmatprep.subr.mxu0 0.0
    %160 = vmatpush1.msra.mxu0 %v141
    %161 = vmatprep.subr.mxu0 0.0
    %162 = vmatpush1.msra.mxu0 %v142
    %163 = vmatprep.subr.mxu0 0.0
    %164 = vmatpush1.msra.mxu0 %v143
    %165 = vmatprep.subr.mxu0 0.0
    %166 = vmatpush1.msra.mxu0 %v144
    %167 = vmatprep.subr.mxu0 0.0
    %168 = vmatpush1.msra.mxu0 0.0
    %169 = vmatprep.subr.mxu0 0.0
    %170 = vmatpush1.msra.mxu0 0.0
    %171 = vmatprep.subr.mxu0 0.0
    %172 = vmatpush1.msra.mxu0 0.0
    %173 = vmatprep.subr.mxu0 0.0
    %174 = vmatpush1.msra.mxu0 0.0
    %175 = vmatprep.subr.mxu0 0.0
    %176 = vmatpush1.msra.mxu0 0.0
    %177 = vmatprep.subr.mxu0 0.0
    %178 = vmatpush1.msra.mxu0 0.0
    %179 = vmatprep.subr.mxu0 0.0
    %180 = vmatpush1.msra.mxu0 0.0
    %181 = vmatprep.subr.mxu0 0.0
    %182 = vmatpush1.msra.mxu0 0.0
    %183 = vmatprep.subr.mxu0 0.0
    %184 = vmatpush1.msra.mxu0 0.0
    %185 = vmatprep.subr.mxu0 0.0
    %186 = vmatpush1.msra.mxu0 0.0
    %187 = vmatprep.subr.mxu0 0.0
    %188 = vmatpush1.msra.mxu0 0.0
    %189 = vmatprep.subr.mxu0 0.0
    %190 = vmatpush1.msra.mxu0 0.0
    %191 = vmatprep.subr.mxu0 0.0
    %192 = vmatpush1.msra.mxu0 0.0
    %193 = vmatprep.subr.mxu0 0.0
    %194 = vmatpush1.msra.mxu0 0.0
    %195 = vmatprep.subr.mxu0 0.0
    %196 = vmatpush1.msra.mxu0 0.0
    %197 = vmatprep.subr.mxu0 0.0
    %198 = vmatpush1.msra.mxu0 0.0
    %199 = vmatprep.subr.mxu0 0.0
    %200 = vmatpush1.msra.mxu0 0.0
    %201 = vmatprep.subr.mxu0 0.0
    %202 = vmatpush1.msra.mxu0 0.0
    %203 = vmatprep.subr.mxu0 0.0
    %204 = vmatpush1.msra.mxu0 0.0
    %205 = vmatprep.subr.mxu0 0.0
    %206 = vmatpush1.msra.mxu0 0.0
    %207 = vmatprep.subr.mxu0 0.0
    %208 = vmatpush1.msra.mxu0 0.0
    %209 = vmatprep.subr.mxu0 0.0
    %210 = vmatpush1.msra.mxu0 0.0
    %211 = vmatprep.subr.mxu0 0.0
    %212 = vmatpush1.msra.mxu0 0.0
    %213 = vmatprep.subr.mxu0 0.0
    %214 = vmatpush1.msra.mxu0 0.0
    %215 = vmatprep.subr.mxu0 0.0
    %216 = vmatpush1.msra.mxu0 0.0
    %217 = vmatprep.subr.mxu0 0.0
    %218 = vmatpush1.msra.mxu0 0.0
    %219 = vmatprep.subr.mxu0 0.0
    %220 = vmatpush1.msra.mxu0 0.0
    %221 = vmatprep.subr.mxu0 0.0
    %222 = vmatpush1.msra.mxu0 0.0
    %223 = vmatprep.mubr.f32.mxu0 0.0
    %224 = vmatmul.mubr.f32.gmra.mrb[0].mxu0 %v154
    %v225 = vpop.f32.mrb[0].mxu0
    %v226 = vadd.f32 %v150, %v225
    %v227 = vpop.f32.mrb[0].mxu0
    %228 = vmatprep.mubr.f32.mxu0 0.0
    %229 = vmatmul.mubr.f32.gmra.mrb[0].mxu0 %v157
    %v230 = vpop.f32.mrb[0].mxu0
    %v231 = vadd.f32 %v150, %v230
    %v232 = vpop.f32.mrb[0].mxu0
    %233 = vdwg.mxu0
    %v234 = vtanh.pop %v226
    %v235 = vtanh.pop %v231
    %v236 = vld [vmem:[%s5] sm:$0xff]
    %v237 = vld [vmem:[%s5 + $0x8] sm:$0xff]
    %v238 = vld [vmem:[%s5 + $0x10] sm:$0xff]
    %v239 = vld [vmem:[%s5 + $0x18] sm:$0xff]
    %v240 = vld [vmem:[%s6] sm:$0x1]
    %v242 = vlaneseq
    %v243 = vshrl.u32 %v242, 7
    %v244 = vsub.s32 0, %v243
    %v245 = vrot.slane %v240, %v244
    %v248 = vsel %vm152, %v234, 0
    %v251 = vsel %vm152, %v235, 0
    %253 = vmatprep.subr.mxu0 0.0
    %254 = vmatpush1.msra.mxu0 %v236
    %255 = vmatprep.subr.mxu0 0.0
    %256 = vmatpush1.msra.mxu0 %v237
    %257 = vmatprep.subr.mxu0 0.0
    %258 = vmatpush1.msra.mxu0 %v238
    %259 = vmatprep.subr.mxu0 0.0
    %260 = vmatpush1.msra.mxu0 %v239
    %261 = vmatprep.subr.mxu0 0.0
    %262 = vmatpush1.msra.mxu0 0.0
    %263 = vmatprep.subr.mxu0 0.0
    %264 = vmatpush1.msra.mxu0 0.0
    %265 = vmatprep.subr.mxu0 0.0
    %266 = vmatpush1.msra.mxu0 0.0
    %267 = vmatprep.subr.mxu0 0.0
    %268 = vmatpush1.msra.mxu0 0.0
    %269 = vmatprep.subr.mxu0 0.0
    %270 = vmatpush1.msra.mxu0 0.0
    %271 = vmatprep.subr.mxu0 0.0
    %272 = vmatpush1.msra.mxu0 0.0
    %273 = vmatprep.subr.mxu0 0.0
    %274 = vmatpush1.msra.mxu0 0.0
    %275 = vmatprep.subr.mxu0 0.0
    %276 = vmatpush1.msra.mxu0 0.0
    %277 = vmatprep.subr.mxu0 0.0
    %278 = vmatpush1.msra.mxu0 0.0
    %279 = vmatprep.subr.mxu0 0.0
    %280 = vmatpush1.msra.mxu0 0.0
    %281 = vmatprep.subr.mxu0 0.0
    %282 = vmatpush1.msra.mxu0 0.0
    %283 = vmatprep.subr.mxu0 0.0
    %284 = vmatpush1.msra.mxu0 0.0
    %285 = vmatprep.subr.mxu0 0.0
    %286 = vmatpush1.msra.mxu0 0.0
    %287 = vmatprep.subr.mxu0 0.0
    %288 = vmatpush1.msra.mxu0 0.0
    %289 = vmatprep.subr.mxu0 0.0
    %290 = vmatpush1.msra.mxu0 0.0
    %291 = vmatprep.subr.mxu0 0.0
    %292 = vmatpush1.msra.mxu0 0.0
    %293 = vmatprep.subr.mxu0 0.0
    %294 = vmatpush1.msra.mxu0 0.0
    %295 = vmatprep.subr.mxu0 0.0
    %296 = vmatpush1.msra.mxu0 0.0
    %297 = vmatprep.subr.mxu0 0.0
    %298 = vmatpush1.msra.mxu0 0.0
    %299 = vmatprep.subr.mxu0 0.0
    %300 = vmatpush1.msra.mxu0 0.0
    %301 = vmatprep.subr.mxu0 0.0
    %302 = vmatpush1.msra.mxu0 0.0
    %303 = vmatprep.subr.mxu0 0.0
    %304 = vmatpush1.msra.mxu0 0.0
    %305 = vmatprep.subr.mxu0 0.0
    %306 = vmatpush1.msra.mxu0 0.0
    %307 = vmatprep.subr.mxu0 0.0
    %308 = vmatpush1.msra.mxu0 0.0
    %309 = vmatprep.subr.mxu0 0.0
    %310 = vmatpush1.msra.mxu0 0.0
    %311 = vmatprep.subr.mxu0 0.0
    %312 = vmatpush1.msra.mxu0 0.0
    %313 = vmatprep.subr.mxu0 0.0
    %314 = vmatpush1.msra.mxu0 0.0
    %315 = vmatprep.subr.mxu0 0.0
    %316 = vmatpush1.msra.mxu0 0.0
    %317 = vmatprep.mubr.f32.mxu0 0.0
    %318 = vmatmul.mubr.f32.gmra.mrb[0].mxu0 %v248
    %v319 = vpop.f32.mrb[0].mxu0
    %v320 = vadd.f32 %v245, %v319
    %v321 = vpop.f32.mrb[0].mxu0
    %322 = vmatprep.mubr.f32.mxu0 0.0
    %323 = vmatmul.mubr.f32.gmra.mrb[0].mxu0 %v251
    %v324 = vpop.f32.mrb[0].mxu0
    %v325 = vadd.f32 %v245, %v324
    %v326 = vpop.f32.mrb[0].mxu0
    %327 = vdwg.mxu0
    %v328 = vtanh.pop %v320
    %v329 = vtanh.pop %v325
    %v330 = vld [vmem:[%s7] sm:$0xff]
    %v331 = vld [vmem:[%s7 + $0x8] sm:$0xff]
    %v332 = vld [vmem:[#allocation2] sm:$0x1]
    %v334 = vlaneseq
    %v335 = vshrl.u32 %v334, 7
    %v336 = vsub.s32 0, %v335
    %v337 = vrot.slane %v332, %v336
    %v340 = vsel %vm57, %v328, 0
    %v343 = vsel %vm57, %v329, 0
    %345 = vmatprep.subr.mxu0 0.0
    %346 = vmatpush1.msra.mxu0 %v330
    %347 = vmatprep.subr.mxu0 0.0
    %348 = vmatpush1.msra.mxu0 %v331
    %349 = vmatprep.subr.mxu0 0.0
    %350 = vmatpush1.msra.mxu0 0.0
    %351 = vmatprep.subr.mxu0 0.0
    %352 = vmatpush1.msra.mxu0 0.0
    %353 = vmatprep.subr.mxu0 0.0
    %354 = vmatpush1.msra.mxu0 0.0
    %355 = vmatprep.subr.mxu0 0.0
    %356 = vmatpush1.msra.mxu0 0.0
    %357 = vmatprep.subr.mxu0 0.0
    %358 = vmatpush1.msra.mxu0 0.0
    %359 = vmatprep.subr.mxu0 0.0
    %360 = vmatpush1.msra.mxu0 0.0
    %361 = vmatprep.subr.mxu0 0.0
    %362 = vmatpush1.msra.mxu0 0.0
    %363 = vmatprep.subr.mxu0 0.0
    %364 = vmatpush1.msra.mxu0 0.0
    %365 = vmatprep.subr.mxu0 0.0
    %366 = vmatpush1.msra.mxu0 0.0
    %367 = vmatprep.subr.mxu0 0.0
    %368 = vmatpush1.msra.mxu0 0.0
    %369 = vmatprep.subr.mxu0 0.0
    %370 = vmatpush1.msra.mxu0 0.0
    %371 = vmatprep.subr.mxu0 0.0
    %372 = vmatpush1.msra.mxu0 0.0
    %373 = vmatprep.subr.mxu0 0.0
    %374 = vmatpush1.msra.mxu0 0.0
    %375 = vmatprep.subr.mxu0 0.0
    %376 = vmatpush1.msra.mxu0 0.0
    %377 = vmatprep.subr.mxu0 0.0
    %378 = vmatpush1.msra.mxu0 0.0
    %379 = vmatprep.subr.mxu0 0.0
    %380 = vmatpush1.msra.mxu0 0.0
    %381 = vmatprep.subr.mxu0 0.0
    %382 = vmatpush1.msra.mxu0 0.0
    %383 = vmatprep.subr.mxu0 0.0
    %384 = vmatpush1.msra.mxu0 0.0
    %385 = vmatprep.subr.mxu0 0.0
    %386 = vmatpush1.msra.mxu0 0.0
    %387 = vmatprep.subr.mxu0 0.0
    %388 = vmatpush1.msra.mxu0 0.0
    %389 = vmatprep.subr.mxu0 0.0
    %390 = vmatpush1.msra.mxu0 0.0
    %391 = vmatprep.subr.mxu0 0.0
    %392 = vmatpush1.msra.mxu0 0.0
    %393 = vmatprep.subr.mxu0 0.0
    %394 = vmatpush1.msra.mxu0 0.0
    %395 = vmatprep.subr.mxu0 0.0
    %396 = vmatpush1.msra.mxu0 0.0
    %397 = vmatprep.subr.mxu0 0.0
    %398 = vmatpush1.msra.mxu0 0.0
    %399 = vmatprep.subr.mxu0 0.0
    %400 = vmatpush1.msra.mxu0 0.0
    %401 = vmatprep.subr.mxu0 0.0
    %402 = vmatpush1.msra.mxu0 0.0
    %403 = vmatprep.subr.mxu0 0.0
    %404 = vmatpush1.msra.mxu0 0.0
    %405 = vmatprep.subr.mxu0 0.0
    %406 = vmatpush1.msra.mxu0 0.0
    %407 = vmatprep.subr.mxu0 0.0
    %408 = vmatpush1.msra.mxu0 0.0
    %409 = vmatprep.mubr.f32.mxu0 0.0
    %410 = vmatmul.mubr.f32.gmra.mrb[0].mxu0 %v340
    %v411 = vpop.f32.mrb[0].mxu0
    %v412 = vadd.f32 %v337, %v411
    %v413 = vpop.f32.mrb[0].mxu0
    %414 = vmatprep.mubr.f32.mxu0 0.0
    %415 = vmatmul.mubr.f32.gmra.mrb[0].mxu0 %v343
    %v416 = vpop.f32.mrb[0].mxu0
    %v417 = vadd.f32 %v337, %v416
    %v418 = vpop.f32.mrb[0].mxu0
    %419 = vdwg.mxu0
    %vm420 = vcmask 7168
    %421 = vst.msk [vmem:[%s9] sm:$0xff] %vm420, %v412
    %422 = vst.msk [vmem:[%s9 + $0x8] sm:$0xff] %vm420, %v417
    // Predicated region
    $region42: #{ssvae_forward.1} parent=1 // pred_check
      _
    $region43: #{ssvae_forward.1} parent=1 // pred_check_branch
      %424 = sbr.rel (0) target = $region45
    $region44: #{ssvae_forward.1} parent=1 // pred_region
      _
    $region45: #{ssvae_forward.1} parent=1 // pred_fallthru
      _
    // Predicated region
    $region46: #{ssvae_forward.1} parent=1 // pred_check
      _
    $region47: #{ssvae_forward.1} parent=1 // pred_check_branch
      %426 = sbr.rel (0) target = $region49
    $region48: #{ssvae_forward.1} parent=1 // pred_region
      _
    $region49: #{ssvae_forward.1} parent=1 // pred_fallthru
      _
    %427 = vsyncpa [#allocation4], 1

</llo_original>
